<compile_context>
chip_gen: v7x
topology: tpu7x:2x2x1
jax: 0.10.0
libtpu: 0.0.40
codegen_flags: <defaults>
</compile_context>

<pallas_src>
from math import gcd

import jax
import jax.numpy as jnp
from jax.experimental import pallas as pl
from jax.experimental.pallas import tpu as pltpu  # noqa: F401  (TPU backend)

# -------------------- problem sizes (small, deterministic) -------------------
B = 2    # batch
T = 16   # sequence length (attention time steps)
K = 5    # attention_kernel_size (odd)
F = 8    # attention_n_filters
A = 32   # attention_dim

LANE = 128


def _round_up(x, m):
    return (x + m - 1) // m * m


# ------------------------------- Pallas kernel -------------------------------
def location_layer_kernel(x_ref, w_ref, out_ref):
    """Whole LocationLayer forward as one MXU matmul.

    x_ref:   (B, 2*TP)        zero-padded attention weights, flattened (c, tau)
    w_ref:   (2*TP, T*A_pad)  folded conv+dense weight, block-Toeplitz in time
    out_ref: (B, T*A_pad)     lane-dense output slab (T*A_pad % 128 == 0)
    """
    out_ref[...] = jnp.dot(x_ref[...], w_ref[...],
                           preferred_element_type=jnp.float32)


# --------------------------------- wrapper -----------------------------------
def location_layer(attention_weights_cat, conv_w, dense_w):
    """attention_weights_cat: (B, 2, T) float32 (PyTorch NCW layout).

    conv_w:  (F, 2, K)  torch Conv1d weight layout (out_ch, in_ch, kernel)
    dense_w: (A, F)     torch Linear weight layout (out_features, in_features)

    Returns (B, T, A) float32, matching LocationLayer.forward.
    """
    b, c, t = attention_weights_cat.shape
    f, _, k = conv_w.shape
    a = dense_w.shape[0]
    pad = (k - 1) // 2
    tp = t + 2 * pad

    # ---- one-time weight preprocessing (activation independent) ----
    # Fold conv into dense: Wc[k, c, a] = sum_f conv_w[f, c, k] * dense_w[a, f]
    wc = jnp.einsum('fck,af->kca', conv_w, dense_w)                  # (K, 2, A)
    # Pad A so that T * A_pad is a multiple of 128 -> unmasked lane stores.
    a_pad = _round_up(a, LANE // gcd(t, LANE))
    wc = jnp.pad(wc, ((0, 0), (0, 0), (0, a_pad - a)))               # (K, 2, A_pad)
    # Block-Toeplitz expansion over time:
    #   W_big[c*TP + tau, t*A_pad + a] = Wc[tau - t, c, a] if 0 <= tau-t < K else 0
    tau = jnp.arange(tp)[:, None]                                    # (TP, 1)
    tt = jnp.arange(t)[None, :]                                      # (1, T)
    k_idx = tau - tt                                                 # (TP, T)
    valid = (k_idx >= 0) & (k_idx < k)
    w_gather = wc[jnp.clip(k_idx, 0, k - 1)]                         # (TP, T, 2, A_pad)
    w_big = jnp.where(valid[:, :, None, None], w_gather, 0.0)
    w_big = jnp.transpose(w_big, (2, 0, 1, 3)).reshape(2 * tp, t * a_pad)

    # ---- activation layout plumbing: "same" zero pad in time, flatten (c, tau)
    x_pad = jnp.pad(attention_weights_cat,
                    ((0, 0), (0, 0), (pad, pad))).reshape(b, 2 * tp)  # (B, 2*TP)

    out_flat = pl.pallas_call(
        location_layer_kernel,
        out_shape=jax.ShapeDtypeStruct((b, t * a_pad), jnp.float32),
        in_specs=[
            pl.BlockSpec((b, 2 * tp), lambda: (0, 0)),
            pl.BlockSpec((2 * tp, t * a_pad), lambda: (0, 0)),
        ],
        out_specs=pl.BlockSpec((b, t * a_pad), lambda: (0, 0)),
        cost_estimate=pl.CostEstimate(
            flops=2 * b * (2 * tp) * (t * a_pad),
            transcendentals=0,
            bytes_accessed=4 * (b * 2 * tp + 2 * tp * t * a_pad + b * t * a_pad)),
    )(x_pad, w_big)

    # Strip lane padding and restore (B, T, A) outside the kernel.
    return out_flat.reshape(b, t, a_pad)[..., :a]


# ------------------------- pure-JAX reference (check) ------------------------
def location_layer_ref(attention_weights_cat, conv_w, dense_w):
    b, c, t = attention_weights_cat.shape
    f, _, k = conv_w.shape
    pad = (k - 1) // 2
    x_pad = jnp.pad(attention_weights_cat, ((0, 0), (0, 0), (pad, pad)))
    cols = jnp.stack([x_pad[:, :, i:i + t] for i in range(k)], axis=-1)  # (B,2,T,K)
    conv_out = jnp.einsum('bctk,fck->bft', cols, conv_w)                 # (B,F,T)
    conv_t = jnp.transpose(conv_out, (0, 2, 1))                          # (B,T,F)
    return jnp.einsum('btf,af->bta', conv_t, dense_w)                    # (B,T,A)


# ----------------------------------- main ------------------------------------
if __name__ == "__main__":
    key = jax.random.PRNGKey(0)
    k_x, k_conv, k_dense = jax.random.split(key, 3)

    # Deterministic synthetic parameters in PyTorch layouts (no checkpoint load).
    conv_w = jax.random.normal(k_conv, (F, 2, K), dtype=jnp.float32) * 0.3   # Conv1d weight
    dense_w = jax.random.normal(k_dense, (A, F), dtype=jnp.float32) * 0.3    # Linear weight

    # Input: attention_weights_cat (B, 2, T), PyTorch NCW convention.
    attention_weights_cat = jax.random.normal(k_x, (B, 2, T), dtype=jnp.float32)

    out = location_layer(attention_weights_cat, conv_w, dense_w)
    out = jax.block_until_ready(out)

    ref = location_layer_ref(attention_weights_cat, conv_w, dense_w)
    assert out.shape == (B, T, A)
    assert jnp.allclose(out, ref, atol=1e-4, rtol=1e-4)

    print("KERNEL_OK")
</pallas_src>

<mosaic_0001>
module attributes {stable_mosaic.version = 11 : i64} {
  func.func @location_layer_kernel(%arg0: memref<2x40xf32, #tpu.memory_space<vmem>>, %arg1: memref<40x512xf32, #tpu.memory_space<vmem>>, %arg2: memref<2x512xf32, #tpu.memory_space<vmem>>) attributes {dimension_semantics = [], scalar_prefetch = 0 : i64, scratch_operands = 0 : i64, tpu.core_type = #tpu.core_type<tc>} {
    %c0 = arith.constant 0 : index
    %c0_0 = arith.constant 0 : index
    %0 = vector.load %arg0[%c0, %c0_0] : memref<2x40xf32, #tpu.memory_space<vmem>>, vector<2x40xf32>
    %c0_1 = arith.constant 0 : index
    %c0_2 = arith.constant 0 : index
    %1 = vector.load %arg1[%c0_1, %c0_2] : memref<40x512xf32, #tpu.memory_space<vmem>>, vector<40x512xf32>
    %cst = arith.constant dense<0.000000e+00> : vector<2x512xf32>
    %2 = tpu.matmul %0, %1, %cst {dimension_numbers = #tpu.dot_dimension_numbers<[1], [0], [0], [1], [0, 0, 1, 1], [], []>} : vector<2x40xf32>, vector<40x512xf32>, vector<2x512xf32> -> vector<2x512xf32>
    %c0_3 = arith.constant 0 : index
    %c0_4 = arith.constant 0 : index
    %3 = vector.load %arg2[%c0_3, %c0_4] : memref<2x512xf32, #tpu.memory_space<vmem>>, vector<2x512xf32>
    tpu.vector_store %arg2[%c0_3, %c0_4], %2 {strides = array<i32>} : memref<2x512xf32, #tpu.memory_space<vmem>>, vector<2x512xf32>,
    return
  }
}

</mosaic_0001>

<llo_original>
// kernel: tpu_custom_call.1
$region0: #{tpu_custom_call.1}
  #allocation0 [shape = 'u32[]', space=smem, size = 0x4, offset = 0x4, fixed_abs, tag = 'smem constant byte address 0x4 - core index']
  #allocation1 [shape = 'u32[144,128]{1,0:T(1,128)}', space=vmem, size = 0x12000, scoped, tag = 'internal scratch']
  %s0 = inlined_call_operand.hbm [shape: f32[2,40], index: 0, kind: input, shape index: {}]
  %s1 = inlined_call_operand.hbm [shape: f32[40,512], index: 1, kind: input, shape index: {}]
  %s2 = inlined_call_operand.hbm [shape: f32[2,512], index: 2, kind: output, shape index: {}]
  %s3 = sld [smem:[#allocation0]]
  $region26: #{tpu_custom_call.1} parent=0
    _
  %s5 = ssub.s32 1, %s3
  %s6 = scalar_select 0, %s5, %s3
  $region1: #{tpu_custom_call.1} parent=0
    #allocation2 [shape = 'u8[1024]{0}', space=vmem, size = 0x400, scoped, tag = 'input window, operand 0, single buffered']
    #allocation3 [shape = 's32[1]{0}', space=sflag, size = 0x4, scoped, tag = 'scoped memory for tpu_custom_call.1']
    #allocation4 [shape = 's32[1]{0}', space=sflag, size = 0x4, scoped, tag = 'scoped memory for tpu_custom_call.1']
    #allocation5 [shape = 'u8[81920]{0}', space=vmem, size = 0x14000, scoped, tag = 'input window, operand 1, single buffered']
    #allocation6 [shape = 's32[1]{0}', space=sflag, size = 0x4, scoped, tag = 'scoped memory for tpu_custom_call.1']
    #allocation7 [shape = 'u8[4096]{0}', space=vmem, size = 0x1000, scoped, tag = 'output window, operand 0, single buffered']
    %7 = vsyncpa [#allocation3], 0
    %8 = vsyncpa [#allocation6], 0
    %9 = vsyncpa [#allocation4], 0
    // Predicated region
    $region2: #{tpu_custom_call.1} parent=1 // pred_check
      _
    $region3: #{tpu_custom_call.1} parent=1 // pred_check_branch
      %11 = sbr.rel (0) target = $region5
    $region4: #{tpu_custom_call.1} parent=1 // pred_region
      %s13 = ssub.s32 32, 32
      %14 = vsyncadd [#allocation3], %s13
      %s16 = sshll.u32 [#allocation2], 4
      %s17 = int_to_ptr.vmem [resolvable:$true] %s16
      %19 = dma.hbm_to_vmem [thread:$0]  %s0, 32, %s17, [#allocation3]
    $region5: #{tpu_custom_call.1} parent=1 // pred_fallthru
      _
    // Predicated region
    $region6: #{tpu_custom_call.1} parent=1 // pred_check
      _
    $region7: #{tpu_custom_call.1} parent=1 // pred_check_branch
      %21 = sbr.rel (0) target = $region9
    $region8: #{tpu_custom_call.1} parent=1 // pred_region
      %s23 = ssub.s32 2560, 2560
      %24 = vsyncadd [#allocation6], %s23
      %s25 = sshll.u32 [#allocation5], 4
      %s26 = int_to_ptr.vmem [resolvable:$true] %s25
      %31 = dma.hbm_to_vmem [thread:$0]  %s1, 2560, %s26, [#allocation6], 512, 512, 32
    $region9: #{tpu_custom_call.1} parent=1 // pred_fallthru
      _
    // Predicated region
    $region10: #{tpu_custom_call.1} parent=1 // pred_check
      _
    $region11: #{tpu_custom_call.1} parent=1 // pred_check_branch
      %33 = sbr.rel (0) target = $region13
    $region12: #{tpu_custom_call.1} parent=1 // pred_region
      %34 = dma.done [#allocation3], 32
    $region13: #{tpu_custom_call.1} parent=1 // pred_fallthru
      _
    // Predicated region
    $region14: #{tpu_custom_call.1} parent=1 // pred_check
      _
    $region15: #{tpu_custom_call.1} parent=1 // pred_check_branch
      %36 = sbr.rel (0) target = $region17
    $region16: #{tpu_custom_call.1} parent=1 // pred_region
      %37 = dma.done [#allocation6], 2560
    $region17: #{tpu_custom_call.1} parent=1 // pred_fallthru
      _
    %v38 = vld [vmem:[#allocation2] sm:$0x3]
    %v39 = vld [vmem:[#allocation5] sm:$0xff]
    %v40 = vld [vmem:[#allocation5 + $0x8] sm:$0xff]
    %v41 = vld [vmem:[#allocation5 + $0x10] sm:$0xff]
    %v42 = vld [vmem:[#allocation5 + $0x18] sm:$0xff]
    %v43 = vld [vmem:[#allocation5 + $0x20] sm:$0xff]
    %v44 = vld [vmem:[#allocation5 + $0x28] sm:$0xff]
    %v45 = vld [vmem:[#allocation5 + $0x30] sm:$0xff]
    %v46 = vld [vmem:[#allocation5 + $0x38] sm:$0xff]
    %v47 = vld [vmem:[#allocation5 + $0x40] sm:$0xff]
    %v48 = vld [vmem:[#allocation5 + $0x48] sm:$0xff]
    %v49 = vld [vmem:[#allocation5 + $0x50] sm:$0xff]
    %v50 = vld [vmem:[#allocation5 + $0x58] sm:$0xff]
    %v51 = vld [vmem:[#allocation5 + $0x60] sm:$0xff]
    %v52 = vld [vmem:[#allocation5 + $0x68] sm:$0xff]
    %v53 = vld [vmem:[#allocation5 + $0x70] sm:$0xff]
    %v54 = vld [vmem:[#allocation5 + $0x78] sm:$0xff]
    %v55 = vld [vmem:[#allocation5 + $0x80] sm:$0xff]
    %v56 = vld [vmem:[#allocation5 + $0x88] sm:$0xff]
    %v57 = vld [vmem:[#allocation5 + $0x90] sm:$0xff]
    %v58 = vld [vmem:[#allocation5 + $0x98] sm:$0xff]
    %vm59 = vcmask 326656
    %v61 = vsel %vm59, %v38, 0
    %63 = vmatprep.subr.mxu0 %v40
    %64 = vmatpush1.msra.mxu0 %v39
    %65 = vmatprep.subr.mxu0 %v44
    %66 = vmatpush1.msra.mxu0 %v43
    %67 = vmatprep.subr.mxu0 %v48
    %68 = vmatpush1.msra.mxu0 %v47
    %69 = vmatprep.subr.mxu0 %v52
    %70 = vmatpush1.msra.mxu0 %v51
    %71 = vmatprep.subr.mxu0 %v56
    %72 = vmatpush1.msra.mxu0 %v55
    %73 = vmatprep.subr.mxu0 0.0
    %74 = vmatpush1.msra.mxu0 0.0
    %75 = vmatprep.subr.mxu0 0.0
    %76 = vmatpush1.msra.mxu0 0.0
    %77 = vmatprep.subr.mxu0 0.0
    %78 = vmatpush1.msra.mxu0 0.0
    %79 = vmatprep.subr.mxu0 0.0
    %80 = vmatpush1.msra.mxu0 0.0
    %81 = vmatprep.subr.mxu0 0.0
    %82 = vmatpush1.msra.mxu0 0.0
    %83 = vmatprep.subr.mxu0 0.0
    %84 = vmatpush1.msra.mxu0 0.0
    %85 = vmatprep.subr.mxu0 0.0
    %86 = vmatpush1.msra.mxu0 0.0
    %87 = vmatprep.subr.mxu0 0.0
    %88 = vmatpush1.msra.mxu0 0.0
    %89 = vmatprep.subr.mxu0 0.0
    %90 = vmatpush1.msra.mxu0 0.0
    %91 = vmatprep.subr.mxu0 0.0
    %92 = vmatpush1.msra.mxu0 0.0
    %93 = vmatprep.subr.mxu0 0.0
    %94 = vmatpush1.msra.mxu0 0.0
    %95 = vmatprep.subr.mxu0 0.0
    %96 = vmatpush1.msra.mxu0 0.0
    %97 = vmatprep.subr.mxu0 0.0
    %98 = vmatpush1.msra.mxu0 0.0
    %99 = vmatprep.subr.mxu0 0.0
    %100 = vmatpush1.msra.mxu0 0.0
    %101 = vmatprep.subr.mxu0 0.0
    %102 = vmatpush1.msra.mxu0 0.0
    %103 = vmatprep.subr.mxu0 0.0
    %104 = vmatpush1.msra.mxu0 0.0
    %105 = vmatprep.subr.mxu0 0.0
    %106 = vmatpush1.msra.mxu0 0.0
    %107 = vmatprep.subr.mxu0 0.0
    %108 = vmatpush1.msra.mxu0 0.0
    %109 = vmatprep.subr.mxu0 0.0
    %110 = vmatpush1.msra.mxu0 0.0
    %111 = vmatprep.subr.mxu0 0.0
    %112 = vmatpush1.msra.mxu0 0.0
    %113 = vmatprep.subr.mxu0 0.0
    %114 = vmatpush1.msra.mxu0 0.0
    %115 = vmatprep.subr.mxu0 0.0
    %116 = vmatpush1.msra.mxu0 0.0
    %117 = vmatprep.subr.mxu0 0.0
    %118 = vmatpush1.msra.mxu0 0.0
    %119 = vmatprep.subr.mxu0 0.0
    %120 = vmatpush1.msra.mxu0 0.0
    %121 = vmatprep.subr.mxu0 0.0
    %122 = vmatpush1.msra.mxu0 0.0
    %123 = vmatprep.subr.mxu0 0.0
    %124 = vmatpush1.msra.mxu0 0.0
    %125 = vmatprep.subr.mxu0 0.0
    %126 = vmatpush1.msra.mxu0 0.0
    %127 = vmatprep.mubr.f32.mxu0 0.0
    %128 = vmatmul.mubr.f32.gmra.mrb[0].mxu0 %v61
    %v129 = vpop.f32.mrb[0].mxu0
    %v130 = vadd.f32 0.0, %v129
    %v131 = vpop.f32.mrb[0].mxu0
    %v132 = vadd.f32 0.0, %v131
    %133 = vdwg.mxu0
    %134 = vmatprep.subr.mxu0 %v42
    %135 = vmatpush1.msra.mxu0 %v41
    %136 = vmatprep.subr.mxu0 %v46
    %137 = vmatpush1.msra.mxu0 %v45
    %138 = vmatprep.subr.mxu0 %v50
    %139 = vmatpush1.msra.mxu0 %v49
    %140 = vmatprep.subr.mxu0 %v54
    %141 = vmatpush1.msra.mxu0 %v53
    %142 = vmatprep.subr.mxu0 %v58
    %143 = vmatpush1.msra.mxu0 %v57
    %144 = vmatprep.subr.mxu0 0.0
    %145 = vmatpush1.msra.mxu0 0.0
    %146 = vmatprep.subr.mxu0 0.0
    %147 = vmatpush1.msra.mxu0 0.0
    %148 = vmatprep.subr.mxu0 0.0
    %149 = vmatpush1.msra.mxu0 0.0
    %150 = vmatprep.subr.mxu0 0.0
    %151 = vmatpush1.msra.mxu0 0.0
    %152 = vmatprep.subr.mxu0 0.0
    %153 = vmatpush1.msra.mxu0 0.0
    %154 = vmatprep.subr.mxu0 0.0
    %155 = vmatpush1.msra.mxu0 0.0
    %156 = vmatprep.subr.mxu0 0.0
    %157 = vmatpush1.msra.mxu0 0.0
    %158 = vmatprep.subr.mxu0 0.0
    %159 = vmatpush1.msra.mxu0 0.0
    %160 = vmatprep.subr.mxu0 0.0
    %161 = vmatpush1.msra.mxu0 0.0
    %162 = vmatprep.subr.mxu0 0.0
    %163 = vmatpush1.msra.mxu0 0.0
    %164 = vmatprep.subr.mxu0 0.0
    %165 = vmatpush1.msra.mxu0 0.0
    %166 = vmatprep.subr.mxu0 0.0
    %167 = vmatpush1.msra.mxu0 0.0
    %168 = vmatprep.subr.mxu0 0.0
    %169 = vmatpush1.msra.mxu0 0.0
    %170 = vmatprep.subr.mxu0 0.0
    %171 = vmatpush1.msra.mxu0 0.0
    %172 = vmatprep.subr.mxu0 0.0
    %173 = vmatpush1.msra.mxu0 0.0
    %174 = vmatprep.subr.mxu0 0.0
    %175 = vmatpush1.msra.mxu0 0.0
    %176 = vmatprep.subr.mxu0 0.0
    %177 = vmatpush1.msra.mxu0 0.0
    %178 = vmatprep.subr.mxu0 0.0
    %179 = vmatpush1.msra.mxu0 0.0
    %180 = vmatprep.subr.mxu0 0.0
    %181 = vmatpush1.msra.mxu0 0.0
    %182 = vmatprep.subr.mxu0 0.0
    %183 = vmatpush1.msra.mxu0 0.0
    %184 = vmatprep.subr.mxu0 0.0
    %185 = vmatpush1.msra.mxu0 0.0
    %186 = vmatprep.subr.mxu0 0.0
    %187 = vmatpush1.msra.mxu0 0.0
    %188 = vmatprep.subr.mxu0 0.0
    %189 = vmatpush1.msra.mxu0 0.0
    %190 = vmatprep.subr.mxu0 0.0
    %191 = vmatpush1.msra.mxu0 0.0
    %192 = vmatprep.subr.mxu0 0.0
    %193 = vmatpush1.msra.mxu0 0.0
    %194 = vmatprep.subr.mxu0 0.0
    %195 = vmatpush1.msra.mxu0 0.0
    %196 = vmatprep.subr.mxu0 0.0
    %197 = vmatpush1.msra.mxu0 0.0
    %198 = vmatprep.mubr.f32.mxu0 0.0
    %199 = vmatmul.mubr.f32.gmra.mrb[0].mxu0 %v61
    %v200 = vpop.f32.mrb[0].mxu0
    %v201 = vadd.f32 0.0, %v200
    %v202 = vpop.f32.mrb[0].mxu0
    %v203 = vadd.f32 0.0, %v202
    %204 = vdwg.mxu0
    %v209 = vcombine.low %v130, %v132
    %v210 = vcombine.low %v201, %v203
    %v212 = vunpack.c.l.s4 1983009808
    %v213 = vunpack.c.0.s8 %v212
    %v214 = vlaneseq
    %v215 = vshrl.u32 %v214, 7
    %v216 = vsub.s32 %v213, %v215
    %v217 = vrot.slane %v209, %v216
    %v219 = vunpack.c.l.s4 1983009808
    %v220 = vunpack.c.0.s8 %v219
    %v221 = vlaneseq
    %v222 = vshrl.u32 %v221, 7
    %v223 = vsub.s32 %v220, %v222
    %v224 = vrot.slane %v210, %v223
    %v225 = vcombine.low %v217, %v224
    %227 = vst [vmem:[#allocation7] sm:$0xff] %v225
    // Predicated region
    $region18: #{tpu_custom_call.1} parent=1 // pred_check
      _
    $region19: #{tpu_custom_call.1} parent=1 // pred_check_branch
      %229 = sbr.rel (0) target = $region21
    $region20: #{tpu_custom_call.1} parent=1 // pred_region
      %s231 = ssub.s32 128, 128
      %232 = vsyncadd [#allocation4], %s231
      %s234 = sshll.u32 [#allocation7], 4
      %s235 = int_to_ptr.vmem [resolvable:$true] %s234
      %237 = dma.vmem_to_hbm [thread:$0]  %s235, 128, %s2, [#allocation4]
    $region21: #{tpu_custom_call.1} parent=1 // pred_fallthru
      _
    // Predicated region
    $region22: #{tpu_custom_call.1} parent=1 // pred_check
      _
    $region23: #{tpu_custom_call.1} parent=1 // pred_check_branch
      %239 = sbr.rel (0) target = $region25
    $region24: #{tpu_custom_call.1} parent=1 // pred_region
      %240 = dma.done [#allocation4], 128
    $region25: #{tpu_custom_call.1} parent=1 // pred_fallthru
      _
    %241 = vsyncpa [#allocation3], 1
    %242 = vsyncpa [#allocation6], 1
    %243 = vsyncpa [#allocation4], 1

</llo_original>
